<compile_context>
chip_gen: v7x
topology: tpu7x:2x2x1
jax: 0.10.0
libtpu: 0.0.40
codegen_flags: <defaults>
</compile_context>

<pallas_src>
import functools

import jax
import jax.numpy as jnp
from jax.experimental import pallas as pl
from jax.experimental.pallas import tpu as pltpu

_LANE = 128
_SUBLANE = 8


def _cdiv(a, b):
    return -(-a // b)


def _round_up(v, m):
    return ((v + m - 1) // m) * m


def _vmem_capacity_bytes():
    """Physical VMEM per TensorCore; conservative 64 MiB (v7x) fallback."""
    default = 64 * 1024 * 1024
    try:
        info = pltpu.get_tpu_info()
        cap = int(getattr(info, "vmem_capacity_bytes", 0) or 0)
        return cap if cap > 0 else default
    except Exception:
        return default


def _choose_tile(b, d, hw, itemsize):
    """Pick the lane-tile width (multiple of 128) and a scoped-VMEM limit.

    Resident VMEM bytes per output lane:
      2 x double-buffered input block : 2 * D_pad * itemsize
      2 x double-buffered output block: 2 * 8 * itemsize   (1 row pads to 8 sublanes)
      in-kernel f32 temporaries       : 2 * 8 * 4          (accumulator + one row)
    """
    sublane_pack = _SUBLANE if itemsize >= 4 else (32 // itemsize)
    d_pad = _round_up(d, sublane_pack)
    bytes_per_lane = 2 * d_pad * itemsize + 2 * _SUBLANE * itemsize + 2 * _SUBLANE * 4

    vmem_cap = _vmem_capacity_bytes()
    # Use at most half of physical VMEM, never more than 48 MiB, so the scoped
    # limit below stays comfortably inside v7x's 64 MiB while still giving
    # multi-MiB blocks (far past the per-grid-step overhead crossover).
    budget = min(vmem_cap // 2, 48 * 1024 * 1024)

    tn = max(_LANE, (budget // bytes_per_lane) // _LANE * _LANE)
    # Never tile wider than the (lane-rounded) spatial extent.
    tn = min(tn, _round_up(hw, _LANE))
    # Keep >= ~4 grid steps when possible so v7x's two TensorCores both get
    # work and the software pipeline has iterations to overlap.
    min_steps = 4
    if b * _cdiv(hw, tn) < min_steps:
        want_tiles = _cdiv(min_steps, b)
        tn = min(tn, max(_LANE, _round_up(_cdiv(hw, want_tiles), _LANE)))

    footprint = tn * bytes_per_lane
    vmem_limit = int(min(vmem_cap, max(footprint + (16 << 20), 32 << 20)))
    return tn, vmem_limit


def _dispreg_kernel(x_ref, o_ref, *, start, stride):
    # x_ref: (D, TN) tile of the cost volume; o_ref: (1, TN) output tile.
    tn = o_ref.shape[-1]
    acc = jnp.zeros((1, tn), jnp.float32)
    # Unrolled accumulation over the small static disparity axis.  Each step
    # touches a single (1, TN) row, so f32 temporaries stay tiny even when the
    # input is bf16 (no full-tile f32 upcast).
    for i in range(x_ref.shape[0]):
        w = float((start + i) * stride)
        if w == 0.0:
            continue  # zero-weight disparity contributes nothing
        acc = acc + x_ref[pl.ds(i, 1), :].astype(jnp.float32) * jnp.float32(w)
    o_ref[...] = acc.astype(o_ref.dtype)


def disparity_regression2(x, start, end, stride=1):
    """x: (B, D, H, W) with D == end - start. Returns (B, 1, H, W) in x.dtype."""
    B, D, H, W = x.shape
    assert D == end - start, "channel dim must equal number of disparities"

    HW = H * W
    x2 = x.reshape(B, D, HW)

    itemsize = jnp.dtype(x.dtype).itemsize
    tn, vmem_limit = _choose_tile(B, D, HW, itemsize)
    grid = (B, _cdiv(HW, tn))

    kernel = functools.partial(_dispreg_kernel, start=start, stride=stride)

    out = pl.pallas_call(
        kernel,
        out_shape=jax.ShapeDtypeStruct((B, 1, HW), x.dtype),
        grid=grid,
        in_specs=[
            # One batch element, one lane-dense spatial tile per grid step.
            pl.BlockSpec((None, D, tn), lambda b, t: (b, 0, t)),
        ],
        out_specs=pl.BlockSpec((None, 1, tn), lambda b, t: (b, 0, t)),
        compiler_params=pltpu.CompilerParams(
            dimension_semantics=("parallel", "parallel"),
            vmem_limit_bytes=vmem_limit,
        ),
        cost_estimate=pl.CostEstimate(
            flops=2 * B * D * HW,
            transcendentals=0,
            bytes_accessed=B * HW * itemsize * (D + 1),
        ),
    )(x2)

    return out.reshape(B, 1, H, W)


if __name__ == "__main__":
    # Small shapes consistent with the module: batch=2, disparities=12, spatial=16.
    B, H, W = 2, 16, 16
    start, end, stride = 0, 12, 1
    D = end - start

    key = jax.random.PRNGKey(0)
    x = jax.random.uniform(key, (B, D, H, W), dtype=jnp.float32)

    out = jax.block_until_ready(disparity_regression2(x, start, end, stride))

    # Reference check (plain JAX) — same math as the PyTorch forward.
    disp_ref = jnp.arange(start * stride, end * stride, stride,
                          dtype=jnp.float32).reshape(1, D, 1, 1)
    expected = jnp.sum(x * disp_ref, axis=1, keepdims=True)
    assert out.shape == (B, 1, H, W)
    assert jnp.allclose(out, expected, rtol=1e-6, atol=1e-5)

    # bf16 path: f32 accumulation inside the kernel, cast on the final store.
    x_bf16 = x.astype(jnp.bfloat16)
    out_bf16 = jax.block_until_ready(disparity_regression2(x_bf16, start, end, stride))
    expected_bf16 = jnp.sum(
        x_bf16.astype(jnp.float32) * disp_ref, axis=1, keepdims=True
    ).astype(jnp.bfloat16)
    assert jnp.allclose(out_bf16.astype(jnp.float32),
                        expected_bf16.astype(jnp.float32),
                        rtol=2e-2, atol=2e-2)

    # Ragged spatial extent (HW not a multiple of the lane tile): exercises the
    # Pallas-masked final block (no host-side pad / slice anymore).
    H2, W2 = 10, 13
    x_r = jax.random.uniform(jax.random.PRNGKey(1), (B, D, H2, W2), dtype=jnp.float32)
    out_r = jax.block_until_ready(disparity_regression2(x_r, start, end, stride))
    expected_r = jnp.sum(x_r * disp_ref, axis=1, keepdims=True)
    assert out_r.shape == (B, 1, H2, W2)
    assert jnp.allclose(out_r, expected_r, rtol=1e-6, atol=1e-5)

    print("KERNEL_OK")
</pallas_src>

<mosaic_0001>
module attributes {stable_mosaic.version = 11 : i64} {
  func.func @_dispreg_kernel(%arg0: i32, %arg1: i32, %arg2: memref<1x12x128xf32, #tpu.memory_space<vmem>>, %arg3: memref<1x1x128xf32, #tpu.memory_space<vmem>>) attributes {dimension_semantics = [#tpu.dimension_semantics<parallel>, #tpu.dimension_semantics<parallel>], iteration_bounds = array<i64: 2, 2>, scalar_prefetch = 0 : i64, scratch_operands = 0 : i64, tpu.core_type = #tpu.core_type<tc>, window_params = [{transform_indices = @transform_0, window_bounds = array<i64: 1, 12, 128>}, {transform_indices = @transform_1, window_bounds = array<i64: 1, 1, 128>}]} {
    %cst = arith.constant 0.000000e+00 : f32
    %0 = vector.broadcast %cst : f32 to vector<1x128xf32>
    %c0 = arith.constant 0 : index
    %c1 = arith.constant 1 : index
    %c0_0 = arith.constant 0 : index
    %1 = vector.load %arg2[%c0, %c1, %c0_0] : memref<1x12x128xf32, #tpu.memory_space<vmem>>, vector<1x1x128xf32>
    %2 = vector.shape_cast %1 : vector<1x1x128xf32> to vector<1x128xf32>
    %cst_1 = arith.constant 1.000000e+00 : f32
    %3 = vector.broadcast %cst_1 : f32 to vector<1x128xf32>
    %4 = arith.mulf %2, %3 : vector<1x128xf32>
    %5 = arith.addf %0, %4 : vector<1x128xf32>
    %c0_2 = arith.constant 0 : index
    %c2 = arith.constant 2 : index
    %c0_3 = arith.constant 0 : index
    %6 = vector.load %arg2[%c0_2, %c2, %c0_3] : memref<1x12x128xf32, #tpu.memory_space<vmem>>, vector<1x1x128xf32>
    %7 = vector.shape_cast %6 : vector<1x1x128xf32> to vector<1x128xf32>
    %cst_4 = arith.constant 2.000000e+00 : f32
    %8 = vector.broadcast %cst_4 : f32 to vector<1x128xf32>
    %9 = arith.mulf %7, %8 : vector<1x128xf32>
    %10 = arith.addf %5, %9 : vector<1x128xf32>
    %c0_5 = arith.constant 0 : index
    %c3 = arith.constant 3 : index
    %c0_6 = arith.constant 0 : index
    %11 = vector.load %arg2[%c0_5, %c3, %c0_6] : memref<1x12x128xf32, #tpu.memory_space<vmem>>, vector<1x1x128xf32>
    %12 = vector.shape_cast %11 : vector<1x1x128xf32> to vector<1x128xf32>
    %cst_7 = arith.constant 3.000000e+00 : f32
    %13 = vector.broadcast %cst_7 : f32 to vector<1x128xf32>
    %14 = arith.mulf %12, %13 : vector<1x128xf32>
    %15 = arith.addf %10, %14 : vector<1x128xf32>
    %c0_8 = arith.constant 0 : index
    %c4 = arith.constant 4 : index
    %c0_9 = arith.constant 0 : index
    %16 = vector.load %arg2[%c0_8, %c4, %c0_9] : memref<1x12x128xf32, #tpu.memory_space<vmem>>, vector<1x1x128xf32>
    %17 = vector.shape_cast %16 : vector<1x1x128xf32> to vector<1x128xf32>
    %cst_10 = arith.constant 4.000000e+00 : f32
    %18 = vector.broadcast %cst_10 : f32 to vector<1x128xf32>
    %19 = arith.mulf %17, %18 : vector<1x128xf32>
    %20 = arith.addf %15, %19 : vector<1x128xf32>
    %c0_11 = arith.constant 0 : index
    %c5 = arith.constant 5 : index
    %c0_12 = arith.constant 0 : index
    %21 = vector.load %arg2[%c0_11, %c5, %c0_12] : memref<1x12x128xf32, #tpu.memory_space<vmem>>, vector<1x1x128xf32>
    %22 = vector.shape_cast %21 : vector<1x1x128xf32> to vector<1x128xf32>
    %cst_13 = arith.constant 5.000000e+00 : f32
    %23 = vector.broadcast %cst_13 : f32 to vector<1x128xf32>
    %24 = arith.mulf %22, %23 : vector<1x128xf32>
    %25 = arith.addf %20, %24 : vector<1x128xf32>
    %c0_14 = arith.constant 0 : index
    %c6 = arith.constant 6 : index
    %c0_15 = arith.constant 0 : index
    %26 = vector.load %arg2[%c0_14, %c6, %c0_15] : memref<1x12x128xf32, #tpu.memory_space<vmem>>, vector<1x1x128xf32>
    %27 = vector.shape_cast %26 : vector<1x1x128xf32> to vector<1x128xf32>
    %cst_16 = arith.constant 6.000000e+00 : f32
    %28 = vector.broadcast %cst_16 : f32 to vector<1x128xf32>
    %29 = arith.mulf %27, %28 : vector<1x128xf32>
    %30 = arith.addf %25, %29 : vector<1x128xf32>
    %c0_17 = arith.constant 0 : index
    %c7 = arith.constant 7 : index
    %c0_18 = arith.constant 0 : index
    %31 = vector.load %arg2[%c0_17, %c7, %c0_18] : memref<1x12x128xf32, #tpu.memory_space<vmem>>, vector<1x1x128xf32>
    %32 = vector.shape_cast %31 : vector<1x1x128xf32> to vector<1x128xf32>
    %cst_19 = arith.constant 7.000000e+00 : f32
    %33 = vector.broadcast %cst_19 : f32 to vector<1x128xf32>
    %34 = arith.mulf %32, %33 : vector<1x128xf32>
    %35 = arith.addf %30, %34 : vector<1x128xf32>
    %c0_20 = arith.constant 0 : index
    %c8 = arith.constant 8 : index
    %c0_21 = arith.constant 0 : index
    %36 = vector.load %arg2[%c0_20, %c8, %c0_21] : memref<1x12x128xf32, #tpu.memory_space<vmem>>, vector<1x1x128xf32>
    %37 = vector.shape_cast %36 : vector<1x1x128xf32> to vector<1x128xf32>
    %cst_22 = arith.constant 8.000000e+00 : f32
    %38 = vector.broadcast %cst_22 : f32 to vector<1x128xf32>
    %39 = arith.mulf %37, %38 : vector<1x128xf32>
    %40 = arith.addf %35, %39 : vector<1x128xf32>
    %c0_23 = arith.constant 0 : index
    %c9 = arith.constant 9 : index
    %c0_24 = arith.constant 0 : index
    %41 = vector.load %arg2[%c0_23, %c9, %c0_24] : memref<1x12x128xf32, #tpu.memory_space<vmem>>, vector<1x1x128xf32>
    %42 = vector.shape_cast %41 : vector<1x1x128xf32> to vector<1x128xf32>
    %cst_25 = arith.constant 9.000000e+00 : f32
    %43 = vector.broadcast %cst_25 : f32 to vector<1x128xf32>
    %44 = arith.mulf %42, %43 : vector<1x128xf32>
    %45 = arith.addf %40, %44 : vector<1x128xf32>
    %c0_26 = arith.constant 0 : index
    %c10 = arith.constant 10 : index
    %c0_27 = arith.constant 0 : index
    %46 = vector.load %arg2[%c0_26, %c10, %c0_27] : memref<1x12x128xf32, #tpu.memory_space<vmem>>, vector<1x1x128xf32>
    %47 = vector.shape_cast %46 : vector<1x1x128xf32> to vector<1x128xf32>
    %cst_28 = arith.constant 1.000000e+01 : f32
    %48 = vector.broadcast %cst_28 : f32 to vector<1x128xf32>
    %49 = arith.mulf %47, %48 : vector<1x128xf32>
    %50 = arith.addf %45, %49 : vector<1x128xf32>
    %c0_29 = arith.constant 0 : index
    %c11 = arith.constant 11 : index
    %c0_30 = arith.constant 0 : index
    %51 = vector.load %arg2[%c0_29, %c11, %c0_30] : memref<1x12x128xf32, #tpu.memory_space<vmem>>, vector<1x1x128xf32>
    %52 = vector.shape_cast %51 : vector<1x1x128xf32> to vector<1x128xf32>
    %cst_31 = arith.constant 1.100000e+01 : f32
    %53 = vector.broadcast %cst_31 : f32 to vector<1x128xf32>
    %54 = arith.mulf %52, %53 : vector<1x128xf32>
    %55 = arith.addf %50, %54 : vector<1x128xf32>
    %c0_32 = arith.constant 0 : index
    %c0_33 = arith.constant 0 : index
    %c0_34 = arith.constant 0 : index
    %56 = vector.load %arg3[%c0_32, %c0_33, %c0_34] : memref<1x1x128xf32, #tpu.memory_space<vmem>>, vector<1x1x128xf32>
    %57 = vector.shape_cast %56 : vector<1x1x128xf32> to vector<1x128xf32>
    %58 = vector.shape_cast %55 : vector<1x128xf32> to vector<1x1x128xf32>
    tpu.vector_store %arg3[%c0_32, %c0_33, %c0_34], %58 {strides = array<i32>} : memref<1x1x128xf32, #tpu.memory_space<vmem>>, vector<1x1x128xf32>,
    return
  }
  func.func @transform_0(%arg0: i32, %arg1: i32) -> (i32, i32, i32) {
    %c0_i32 = arith.constant 0 : i32
    %c0_i32_0 = arith.constant 0 : i32
    return %arg0, %c0_i32, %arg1 : i32, i32, i32
  }
  func.func @transform_1(%arg0: i32, %arg1: i32) -> (i32, i32, i32) {
    %c0_i32 = arith.constant 0 : i32
    %c0_i32_0 = arith.constant 0 : i32
    return %arg0, %c0_i32, %arg1 : i32, i32, i32
  }
}

</mosaic_0001>

<llo_original>
// kernel: tpu_custom_call.1
$region0: #{tpu_custom_call.1}
  #allocation0 [shape = 'u32[]', space=smem, size = 0x4, offset = 0x4, fixed_abs, tag = 'smem constant byte address 0x4 - core index']
  #allocation1 [shape = 'u32[144,128]{1,0:T(1,128)}', space=vmem, size = 0x12000, scoped, tag = 'internal scratch']
  %s0 = inlined_call_operand.vmem [shape: f32[2,12,256], index: 0, kind: input, shape index: {}]
  %s1 = inlined_call_operand.hbm [shape: f32[2,1,256], index: 1, kind: output, shape index: {}]
  %s2 = sld [smem:[#allocation0]]
  $region75: #{tpu_custom_call.1} parent=0
    _
  %s4 = ssub.s32 1, %s2
  %s5 = scalar_select 0, %s4, %s2
  $region1: #{tpu_custom_call.1} parent=0
    #allocation2 [shape = 'u8[16384]{0}', space=vmem, size = 0x4000, scoped, tag = 'input window, operand 0']
    #allocation3 [shape = 'u8[1024]{0}', space=vmem, size = 0x400, scoped, tag = 'output window, operand 0']
    #allocation4 [shape = 's32[2]{0}', space=sflag, size = 0x8, scoped, tag = 'scoped memory for tpu_custom_call.1']
    %6 = vsyncpa [#allocation4], 0
    %s7 = scalar_lea.sflag [#allocation4], 1
    %8 = vsyncpa %s7, 0
    loop: start=0, step=1, limit=6
    $region2: #{tpu_custom_call.1} parent=1 // loop_pre_header
      _
    $region3: #{tpu_custom_call.1} parent=1 // loop_header
      %s10 = sphi 0, %s14
      %p11 = scmp.ge.s32.totalorder %s10, 6
      %s17 = sphi 0, %s29
      %s18 = sphi 0, %s25
      %s19 = sphi 0, %s17
      %s20 = sphi 0, %s18
      %s21 = sphi 0, %s19
      %s22 = sphi 0, %s20
      %s34 = sphi 0, %s36
      %s37 = sphi 0, %s34
      %s38 = sphi 0, %s37
      %s54 = sphi 0, %s38
      %s62 = sphi 0, %s64
      %s65 = sphi 0, %s62
      %s66 = sphi 0, %s65
      %s82 = sphi 0, %s66
    $region4: #{tpu_custom_call.1} parent=1 // loop_header_branch
      %13 = sbr.rel (%p11) target = $region8
    $region5: #{tpu_custom_call.1} parent=1 // loop_body
      %s15 = ssub.s32 %s10, 1
      %s16 = ssub.s32 %s10, 2
      %s23 = sadd.s32 1, %s18
      %p24 = scmp.ge.s32.totalorder %s23, 2
      %s25 = scalar_select %p24, 0, %s23
      %s26 = sadd.s32 1, %s17
      %s27 = scalar_select %p24, %s26, %s17
      %p28 = scmp.ge.s32.totalorder %s27, 2
      %s29 = scalar_select %p28, 0, %s27
      %s30 = ssub.s32 %s17, %s29
      %s31 = ssub.s32 %s18, %s25
      %s32 = sor.u32 %s30, %s31
      %p33 = scmp.eq.s32.totalorder %s32, 0
      %s35 = sadd.s32 %s34, 1
      %s36 = scalar_select %p33, %s34, %s35
      %p39 = pneg %p33
      %p40 = scmp.eq.s32.totalorder %s10, 3
      %p41 = por %p39, %p40
      %p42 = scmp.ne.s32.totalorder %s34, %s37
      %p43 = scmp.eq.s32.totalorder %s10, 0
      %p44 = por %p42, %p43
      %p45 = scmp.ne.s32.totalorder %s34, %s37
      %p46 = scmp.eq.s32.totalorder %s15, 3
      %p47 = por %p45, %p46
      %p48 = scmp.ne.s32.totalorder %s37, %s38
      %p49 = scmp.eq.s32.totalorder %s15, 0
      %p50 = por %p48, %p49
      %p51 = scmp.ne.s32.totalorder %s37, %s38
      %p52 = scmp.eq.s32.totalorder %s16, 3
      %p53 = por %p51, %p52
      %p55 = scmp.ne.s32.totalorder %s38, %s54
      %p56 = scmp.eq.s32.totalorder %s16, 0
      %p57 = por %p55, %p56
      %s58 = ssub.s32 %s17, %s29
      %s59 = ssub.s32 %s18, %s25
      %s60 = sor.u32 %s58, %s59
      %p61 = scmp.eq.s32.totalorder %s60, 0
      %s63 = sadd.s32 %s62, 1
      %s64 = scalar_select %p61, %s62, %s63
      %p67 = pneg %p61
      %p68 = scmp.eq.s32.totalorder %s10, 3
      %p69 = por %p67, %p68
      %p70 = scmp.ne.s32.totalorder %s62, %s65
      %p71 = scmp.eq.s32.totalorder %s10, 0
      %p72 = por %p70, %p71
      %p73 = scmp.ne.s32.totalorder %s62, %s65
      %p74 = scmp.eq.s32.totalorder %s15, 3
      %p75 = por %p73, %p74
      %p76 = scmp.ne.s32.totalorder %s65, %s66
      %p77 = scmp.eq.s32.totalorder %s15, 0
      %p78 = por %p76, %p77
      %p79 = scmp.ne.s32.totalorder %s65, %s66
      %p80 = scmp.eq.s32.totalorder %s16, 3
      %p81 = por %p79, %p80
      %p83 = scmp.ne.s32.totalorder %s66, %s82
      %p84 = scmp.eq.s32.totalorder %s16, 0
      %p85 = por %p83, %p84
      %p86 = scmp.le.s32.totalorder 1, %s10
      %p87 = scmp.lt.s32.totalorder %s10, 5
      %p88 = pnand %p86, %p87
      %p89 = pneg %p88
      // Predicated region
      $region9: #{tpu_custom_call.1} parent=5 // pred_check
        _
      $region10: #{tpu_custom_call.1} parent=5 // pred_check_branch
        %91 = sbr.rel (%p88) target = $region12
      $region11: #{tpu_custom_call.1} parent=5 // pred_region
        %s92 = ssub.s32 %s10, 1
      $region12: #{tpu_custom_call.1} parent=5 // pred_fallthru
        _
      %p93 = scmp.lt.s32.totalorder %s10, 4
      // Predicated region
      $region13: #{tpu_custom_call.1} parent=5 // pred_check
        %p94 = pneg %p93
      $region14: #{tpu_custom_call.1} parent=5 // pred_check_branch
        %96 = sbr.rel (%p94) target = $region16
      $region15: #{tpu_custom_call.1} parent=5 // pred_region
        // Predicated region
        $region17: #{tpu_custom_call.1} parent=15 // pred_check
          %p97 = pneg %p44
        $region18: #{tpu_custom_call.1} parent=15 // pred_check_branch
          %99 = sbr.rel (%p97) target = $region20
        $region19: #{tpu_custom_call.1} parent=15 // pred_region
          %s100 = sand.u32 %s34, 1
          %s101 = sand.u32 %s34, 1
          %s102 = smul.addr %s101, 16
          %s103 = scalar_lea.vmem [#allocation2], %s102
          %s104 = smul.addr %s17, 4
          %s105 = sadd.s32 %s18, %s104
          %s106 = smul.addr %s105, 8
          %s107 = scalar_lea.vmem %s0, %s106
          // Predicated region
          $region21: #{tpu_custom_call.1} parent=19 // pred_check
            _
          $region22: #{tpu_custom_call.1} parent=19 // pred_check_branch
            %109 = sbr.rel (0) target = $region24
          $region23: #{tpu_custom_call.1} parent=19 // pred_region
            // Predicated region
            $region25: #{tpu_custom_call.1} parent=23 // pred_check
              _
            $region26: #{tpu_custom_call.1} parent=23 // pred_check_branch
              %111 = sbr.rel (0) target = $region28
            $region27: #{tpu_custom_call.1} parent=23 // pred_region
              // Predicated region
              $region40: #{tpu_custom_call.1} parent=27 // pred_check
                _
              $region41: #{tpu_custom_call.1} parent=27 // pred_check_branch
                %128 = sbr.rel (0) target = $region43
              $region42: #{tpu_custom_call.1} parent=27 // pred_region
                loop: start=0, step=1, limit=1
                $region44: #{tpu_custom_call.1} parent=42 // loop_pre_header
                  _
                $region45: #{tpu_custom_call.1} parent=42 // loop_header
                  %s130 = sphi 0, %s134
                  %p131 = scmp.ge.s32.totalorder %s130, 1
                  %s135 = sphi %s107, %s107
                  %s136 = sphi %s103, %s103
                $region46: #{tpu_custom_call.1} parent=42 // loop_header_branch
                  %133 = sbr.rel (%p131) target = $region50
                $region47: #{tpu_custom_call.1} parent=42 // loop_body
                  %v137 = vld [vmem:[%s135] sm:$0xff]
                  %138 = vst [vmem:[%s136] sm:$0xff] %v137
                  %v139 = vld [vmem:[%s135 + $0x10] sm:$0xff]
                  %140 = vst [vmem:[%s136 + $0x8] sm:$0xff] %v139
                $region48: #{tpu_custom_call.1} parent=42 // loop_footer
                  %s134 = sadd.s32 1, %s130
                $region49: #{tpu_custom_call.1} parent=42 // loop_footer_branch
                  %129 = sbr.rel target = $region45
                $region50: #{tpu_custom_call.1} parent=42 // loop_exit
                  _
              $region43: #{tpu_custom_call.1} parent=27 // pred_fallthru
                _
              // Predicated region
              $region51: #{tpu_custom_call.1} parent=27 // pred_check
                _
              $region52: #{tpu_custom_call.1} parent=27 // pred_check_branch
                %142 = sbr.rel target = $region54
              $region53: #{tpu_custom_call.1} parent=27 // pred_region
                _
              $region54: #{tpu_custom_call.1} parent=27 // pred_fallthru
                _
            $region28: #{tpu_custom_call.1} parent=23 // pred_fallthru
              _
            // Predicated region
            $region29: #{tpu_custom_call.1} parent=23 // pred_check
              _
            $region30: #{tpu_custom_call.1} parent=23 // pred_check_branch
              %113 = sbr.rel target = $region32
            $region31: #{tpu_custom_call.1} parent=23 // pred_region
              loop: start=0, step=1, limit=1
              $region33: #{tpu_custom_call.1} parent=31 // loop_pre_header
                _
              $region34: #{tpu_custom_call.1} parent=31 // loop_header
                %s116 = sphi 0, %s120
                %p117 = scmp.ge.s32.totalorder %s116, 1
                %s121 = sphi %s107, %s107
                %s122 = sphi %s103, %s103
              $region35: #{tpu_custom_call.1} parent=31 // loop_header_branch
                %119 = sbr.rel (%p117) target = $region39
              $region36: #{tpu_custom_call.1} parent=31 // loop_body
                %v123 = vld [vmem:[%s121] sm:$0xff]
                %124 = vst [vmem:[%s122] sm:$0xff] %v123
                %v125 = vld [vmem:[%s121 + $0x10] sm:$0xff]
                %126 = vst [vmem:[%s122 + $0x8] sm:$0xff] %v125
              $region37: #{tpu_custom_call.1} parent=31 // loop_footer
                %s120 = sadd.s32 1, %s116
              $region38: #{tpu_custom_call.1} parent=31 // loop_footer_branch
                %115 = sbr.rel target = $region34
              $region39: #{tpu_custom_call.1} parent=31 // loop_exit
                _
            $region32: #{tpu_custom_call.1} parent=23 // pred_fallthru
              _
          $region24: #{tpu_custom_call.1} parent=19 // pred_fallthru
            _
          %143 = vnop
        $region20: #{tpu_custom_call.1} parent=15 // pred_fallthru
          _
      $region16: #{tpu_custom_call.1} parent=5 // pred_fallthru
        _
      %p144 = scmp.le.s32.totalorder 1, %s10
      %p145 = scmp.lt.s32.totalorder %s10, 5
      %p146 = pnand %p144, %p145
      %p147 = pneg %p146
      // Predicated region
      $region55: #{tpu_custom_call.1} parent=5 // pred_check
        _
      $region56: #{tpu_custom_call.1} parent=5 // pred_check_branch
        %149 = sbr.rel (%p146) target = $region58
      $region57: #{tpu_custom_call.1} parent=5 // pred_region
        %s150 = ssub.s32 %s10, 1
        %s151 = sand.u32 %s37, 1
        %s152 = sand.u32 %s37, 1
        %s153 = smul.addr %s152, 16
        %s154 = scalar_lea.vmem [#allocation2], %s153
        // Predicated region
        $region59: #{tpu_custom_call.1} parent=57 // pred_check
          %p155 = pneg %p50
        $region60: #{tpu_custom_call.1} parent=57 // pred_check_branch
          %157 = sbr.rel (%p155) target = $region62
        $region61: #{tpu_custom_call.1} parent=57 // pred_region
          _
        $region62: #{tpu_custom_call.1} parent=57 // pred_fallthru
          _
        %s158 = sand.u32 %s37, 1
        %s159 = sand.u32 %s37, 1
        %s160 = smul.addr %s159, 16
        %s161 = scalar_lea.vmem [#allocation2], %s160
        %p162 = pneg %p50
        %p163 = pneg %p47
        %p164 = pneg %p78
        %p165 = pneg %p75
        %s166 = sand.u32 %s65, 1
        %s167 = scalar_lea.sflag [#allocation4], %s166
        %s168 = sand.u32 %s65, 1
        %s169 = scalar_lea.vmem [#allocation3], %s168
        %v170 = vld [vmem:[%s154 + $0x1] sm:$0x1]
        %v171 = vadd.f32 %v170, 0.0
        %v172 = vld [vmem:[%s154 + $0x2] sm:$0x1]
        %v173 = vmul.f32 %v172, 2.0
        %v174 = vadd.f32 %v171, %v173
        %v175 = vld [vmem:[%s154 + $0x3] sm:$0x1]
        %v176 = vmul.f32 %v175, 3.0
        %v177 = vadd.f32 %v174, %v176
        %v178 = vld [vmem:[%s154 + $0x4] sm:$0x1]
        %v179 = vmul.f32 %v178, 4.0
        %v180 = vadd.f32 %v177, %v179
        %v181 = vld [vmem:[%s154 + $0x5] sm:$0x1]
        %v182 = vmul.f32 %v181, 5.0
        %v183 = vadd.f32 %v180, %v182
        %v184 = vld [vmem:[%s154 + $0x6] sm:$0x1]
        %v185 = vmul.f32 %v184, 6.0
        %v186 = vadd.f32 %v183, %v185
        %v187 = vld [vmem:[%s154 + $0x7] sm:$0x1]
        %v188 = vmul.f32 %v187, 7.0
        %v189 = vadd.f32 %v186, %v188
        %v190 = vld [vmem:[%s154 + $0x8] sm:$0x1]
        %v191 = vmul.f32 %v190, 8.0
        %v192 = vadd.f32 %v189, %v191
        %v193 = vld [vmem:[%s154 + $0x9] sm:$0x1]
        %v194 = vmul.f32 %v193, 9.0
        %v195 = vadd.f32 %v192, %v194
        %v196 = vld [vmem:[%s154 + $0xa] sm:$0x1]
        %v197 = vmul.f32 %v196, 10.0
        %v198 = vadd.f32 %v195, %v197
        %v199 = vld [vmem:[%s154 + $0xb] sm:$0x1]
        %v200 = vmul.f32 %v199, 11.0
        %v201 = vadd.f32 %v198, %v200
        %202 = vst [vmem:[%s169] sm:$0x1] %v201
        %s203 = sand.u32 %s65, 1
        %s204 = scalar_lea.sflag [#allocation4], %s203
        %s205 = sand.u32 %s65, 1
        %s206 = scalar_lea.vmem [#allocation3], %s205
        // Predicated region
        $region63: #{tpu_custom_call.1} parent=57 // pred_check
          %p207 = pneg %p75
        $region64: #{tpu_custom_call.1} parent=57 // pred_check_branch
          %209 = sbr.rel (%p207) target = $region66
        $region65: #{tpu_custom_call.1} parent=57 // pred_region
          %s211 = ssub.s32 16, 16
          %212 = vsyncadd %s204, %s211
          %s213 = smul.addr %s19, 2
          %s214 = sadd.s32 %s20, %s213
          %s215 = smul.addr %s214, 16
          %s216 = scalar_lea.hbm %s1, %s215
          %s218 = sshll.u32 %s206, 4
          %s219 = int_to_ptr.vmem [resolvable:$true] %s218
          %221 = dma.vmem_to_hbm [thread:$0]  %s219, 16, %s216, %s204
        $region66: #{tpu_custom_call.1} parent=57 // pred_fallthru
          _
      $region58: #{tpu_custom_call.1} parent=5 // pred_fallthru
        _
      %p222 = scmp.le.s32.totalorder 2, %s10
      // Predicated region
      $region67: #{tpu_custom_call.1} parent=5 // pred_check
        %p223 = pneg %p222
      $region68: #{tpu_custom_call.1} parent=5 // pred_check_branch
        %225 = sbr.rel (%p223) target = $region70
      $region69: #{tpu_custom_call.1} parent=5 // pred_region
        %s226 = ssub.s32 %s10, 2
        // Predicated region
        $region71: #{tpu_custom_call.1} parent=69 // pred_check
          %p227 = pneg %p81
        $region72: #{tpu_custom_call.1} parent=69 // pred_check_branch
          %229 = sbr.rel (%p227) target = $region74
        $region73: #{tpu_custom_call.1} parent=69 // pred_region
          %s230 = sand.u32 %s66, 1
          %s231 = scalar_lea.sflag [#allocation4], %s230
          %s232 = sand.u32 %s66, 1
          %s233 = scalar_lea.vmem [#allocation3], %s232
          %234 = dma.done %s231, 16
        $region74: #{tpu_custom_call.1} parent=69 // pred_fallthru
          _
      $region70: #{tpu_custom_call.1} parent=5 // pred_fallthru
        _
    $region6: #{tpu_custom_call.1} parent=1 // loop_footer
      %s14 = sadd.s32 1, %s10
    $region7: #{tpu_custom_call.1} parent=1 // loop_footer_branch
      %9 = sbr.rel target = $region3
    $region8: #{tpu_custom_call.1} parent=1 // loop_exit
      _
    %235 = vsyncpa [#allocation4], 1
    %s236 = scalar_lea.sflag [#allocation4], 1
    %237 = vsyncpa %s236, 1

</llo_original>
